<compile_context>
chip_gen: v5e
topology: v5e:2x2
jax: 0.10.0
libtpu: 0.0.40
codegen_flags: <defaults>
</compile_context>

<pallas_src>
import functools
import math

import jax
import jax.numpy as jnp
from jax.experimental import pallas as pl
from jax.experimental.pallas import tpu as pltpu

LN_EPS = 1e-5


def layernorm_kernel(x_ref, gamma_ref, beta_ref, o_ref, *, inv_h, eps):
    x = x_ref[...].astype(jnp.float32)          # (rows, H) f32 working copy
    g = gamma_ref[...].astype(jnp.float32)      # (1, H)
    b = beta_ref[...].astype(jnp.float32)       # (1, H)

    # Mean over the real hidden lanes (block last dim == full H, no padding).
    u = jnp.sum(x, axis=-1, keepdims=True) * inv_h

    # Two-pass centered variance (more stable than E[x^2] - u^2), eps inside
    # the rsqrt (TF-style), rsqrt on the EUP.
    centered = x - u
    s = jnp.sum(centered * centered, axis=-1, keepdims=True) * inv_h
    normed = centered * jax.lax.rsqrt(s + eps)

    o_ref[...] = (g * normed + b).astype(o_ref.dtype)


@functools.lru_cache(maxsize=None)
def _vmem_cap_bytes():
    """Per-generation cap on vmem_limit_bytes (leave headroom below physical)."""
    try:
        phys = int(pltpu.get_tpu_info().vmem_capacity_bytes)
    except Exception:
        phys = 64 * 1024 * 1024  # conservative fallback (v7x-sized)
    if phys <= 64 * 1024 * 1024:
        return 48 * 1024 * 1024   # v7x: 64 MiB physical -> cap at 48 MiB
    return 96 * 1024 * 1024       # v5e/v6e: 128 MiB physical -> cap at 96 MiB


def _round_up(x, m):
    return ((x + m - 1) // m) * m


@functools.partial(jax.jit, static_argnames=("block_rows", "eps"))
def bert_layer_norm(x, weight, bias, *, block_rows=1024, eps=LN_EPS):
    """LayerNorm over the last dim of x. weight/bias: shape (hidden,)."""
    orig_shape = x.shape
    H = orig_shape[-1]
    R = int(math.prod(orig_shape[:-1])) if len(orig_shape) > 1 else 1
    x2 = x.reshape(R, H)            # metadata-only; no extra HBM pass
    gr = weight.reshape(1, H)
    br = bias.reshape(1, H)

    # --- Row-tile sizing ----------------------------------------------------
    # Per-row VMEM footprint of one grid step:
    #   2x double-buffered input tile + 2x double-buffered output tile
    #   (input dtype) + ~4 f32 row-temporaries (x upcast, centered, normed,
    #   product) materialized in-kernel.
    itemsize = x.dtype.itemsize
    bytes_per_row = H * (4 * itemsize + 4 * 4)

    vmem_cap = _vmem_cap_bytes()
    max_rows_by_vmem = max(8, (vmem_cap // max(bytes_per_row, 1)) // 8 * 8)

    # Keep at least 2 grid steps so the "parallel" row axis can split across
    # v7x's two TensorCores (no-op / harmless on 1-TC v5e/v6e).
    max_rows_for_two_steps = max(8, _round_up(pl.cdiv(R, 2), 8))

    rows8 = max(8, _round_up(R, 8))
    tile_rows = max(8, min(int(block_rows), rows8) // 8 * 8)
    tile_rows = min(tile_rows, max_rows_by_vmem, max_rows_for_two_steps)

    grid = (pl.cdiv(R, tile_rows),)

    # Last block dim == full H (legal even when H % 128 != 0); no pad/slice
    # HBM passes in the wrapper.
    row_spec = pl.BlockSpec((tile_rows, H), lambda i: (i, 0))
    vec_spec = pl.BlockSpec((1, H), lambda i: (0, 0))

    # VMEM limit: actual working set + headroom, clamped to [32 MiB, per-chip cap].
    working_set = bytes_per_row * tile_rows
    vmem_limit = int(min(vmem_cap, max(32 * 1024 * 1024, working_set + (4 << 20))))

    out2 = pl.pallas_call(
        functools.partial(layernorm_kernel, inv_h=1.0 / float(H), eps=eps),
        out_shape=jax.ShapeDtypeStruct((R, H), x.dtype),
        grid_spec=pltpu.PrefetchScalarGridSpec(
            num_scalar_prefetch=0,
            grid=grid,
            in_specs=[
                row_spec,   # x tile
                vec_spec,   # weight (gamma)
                vec_spec,   # bias (beta)
            ],
            out_specs=row_spec,
        ),
        compiler_params=pltpu.CompilerParams(
            dimension_semantics=("parallel",),
            vmem_limit_bytes=vmem_limit,
        ),
    )(x2, gr, br)

    return out2.reshape(orig_shape)


def reference_layernorm(x, weight, bias, eps=LN_EPS):
    """Pure-JAX reference mirroring the PyTorch BertLayerNorm forward."""
    u = x.mean(-1, keepdims=True)
    s = ((x - u) ** 2).mean(-1, keepdims=True)
    xn = (x - u) / jnp.sqrt(s + eps)
    return weight * xn + bias


if __name__ == "__main__":
    B, S, H = 2, 8, 32  # batch, seq, hidden_size (H not a multiple of 128 on purpose)

    key = jax.random.PRNGKey(0)
    kx, kg, kb = jax.random.split(key, 3)

    x = jax.random.normal(kx, (B, S, H), dtype=jnp.float32)
    # BertLayerNorm init is ones/zeros; use perturbed values so the affine
    # part of the kernel is actually exercised.
    gamma = 1.0 + 0.1 * jax.random.normal(kg, (H,), dtype=jnp.float32)
    beta = 0.1 * jax.random.normal(kb, (H,), dtype=jnp.float32)

    out = bert_layer_norm(x, gamma, beta)
    out = jax.block_until_ready(out)

    ref = reference_layernorm(x, gamma, beta)
    assert out.shape == (B, S, H)
    assert jnp.allclose(out, ref, atol=1e-5, rtol=1e-5), "mismatch vs reference"

    print("KERNEL_OK")
</pallas_src>

<mosaic_0001>
module attributes {stable_mosaic.version = 11 : i64} {
  func.func @layernorm_kernel(%arg0: i32, %arg1: memref<8x32xf32, #tpu.memory_space<vmem>>, %arg2: memref<1x32xf32, #tpu.memory_space<vmem>>, %arg3: memref<1x32xf32, #tpu.memory_space<vmem>>, %arg4: memref<8x32xf32, #tpu.memory_space<vmem>>) attributes {dimension_semantics = [#tpu.dimension_semantics<parallel>], iteration_bounds = array<i64: 2>, scalar_prefetch = 0 : i64, scratch_operands = 0 : i64, tpu.core_type = #tpu.core_type<tc>, window_params = [{transform_indices = @transform_0, window_bounds = array<i64: 8, 32>}, {pipeline_mode = #tpu.pipeline_mode<synchronous>, transform_indices = @transform_1, window_bounds = array<i64: 1, 32>}, {pipeline_mode = #tpu.pipeline_mode<synchronous>, transform_indices = @transform_2, window_bounds = array<i64: 1, 32>}, {transform_indices = @transform_3, window_bounds = array<i64: 8, 32>}]} {
    %c0 = arith.constant 0 : index
    %c0_0 = arith.constant 0 : index
    %0 = vector.load %arg1[%c0, %c0_0] : memref<8x32xf32, #tpu.memory_space<vmem>>, vector<8x32xf32>
    %c0_1 = arith.constant 0 : index
    %c0_2 = arith.constant 0 : index
    %1 = vector.load %arg2[%c0_1, %c0_2] : memref<1x32xf32, #tpu.memory_space<vmem>>, vector<1x32xf32>
    %c0_3 = arith.constant 0 : index
    %c0_4 = arith.constant 0 : index
    %2 = vector.load %arg3[%c0_3, %c0_4] : memref<1x32xf32, #tpu.memory_space<vmem>>, vector<1x32xf32>
    %cst = arith.constant dense<0.000000e+00> : vector<8xf32>
    %3 = vector.multi_reduction <add>, %0, %cst [1] : vector<8x32xf32> to vector<8xf32>
    %4 = vector.shape_cast %3 : vector<8xf32> to vector<8x1xf32>
    %cst_5 = arith.constant 3.125000e-02 : f32
    %5 = vector.broadcast %cst_5 : f32 to vector<8x1xf32>
    %6 = arith.mulf %4, %5 : vector<8x1xf32>
    %7 = vector.broadcast %6 : vector<8x1xf32> to vector<8x32xf32>
    %8 = arith.subf %0, %7 : vector<8x32xf32>
    %9 = arith.mulf %8, %8 : vector<8x32xf32>
    %cst_6 = arith.constant dense<0.000000e+00> : vector<8xf32>
    %10 = vector.multi_reduction <add>, %9, %cst_6 [1] : vector<8x32xf32> to vector<8xf32>
    %11 = vector.shape_cast %10 : vector<8xf32> to vector<8x1xf32>
    %cst_7 = arith.constant 3.125000e-02 : f32
    %12 = vector.broadcast %cst_7 : f32 to vector<8x1xf32>
    %13 = arith.mulf %11, %12 : vector<8x1xf32>
    %cst_8 = arith.constant 9.99999974E-6 : f32
    %14 = vector.broadcast %cst_8 : f32 to vector<8x1xf32>
    %15 = arith.addf %13, %14 : vector<8x1xf32>
    %16 = math.rsqrt %15 : vector<8x1xf32>
    %17 = vector.broadcast %16 : vector<8x1xf32> to vector<8x32xf32>
    %18 = arith.mulf %8, %17 : vector<8x32xf32>
    %19 = vector.broadcast %1 : vector<1x32xf32> to vector<8x32xf32>
    %20 = arith.mulf %19, %18 : vector<8x32xf32>
    %21 = vector.broadcast %2 : vector<1x32xf32> to vector<8x32xf32>
    %22 = arith.addf %20, %21 : vector<8x32xf32>
    %c0_9 = arith.constant 0 : index
    %c0_10 = arith.constant 0 : index
    %23 = vector.load %arg4[%c0_9, %c0_10] : memref<8x32xf32, #tpu.memory_space<vmem>>, vector<8x32xf32>
    tpu.vector_store %arg4[%c0_9, %c0_10], %22 {strides = array<i32>} : memref<8x32xf32, #tpu.memory_space<vmem>>, vector<8x32xf32>,
    return
  }
  func.func @transform_0(%arg0: i32) -> (i32, i32) {
    %c0_i32 = arith.constant 0 : i32
    %c0_i32_0 = arith.constant 0 : i32
    return %arg0, %c0_i32 : i32, i32
  }
  func.func @transform_1(%arg0: i32) -> (i32, i32) {
    %c0_i32 = arith.constant 0 : i32
    %c0_i32_0 = arith.constant 0 : i32
    %c0_i32_1 = arith.constant 0 : i32
    return %c0_i32, %c0_i32_0 : i32, i32
  }
  func.func @transform_2(%arg0: i32) -> (i32, i32) {
    %c0_i32 = arith.constant 0 : i32
    %c0_i32_0 = arith.constant 0 : i32
    %c0_i32_1 = arith.constant 0 : i32
    return %c0_i32, %c0_i32_0 : i32, i32
  }
  func.func @transform_3(%arg0: i32) -> (i32, i32) {
    %c0_i32 = arith.constant 0 : i32
    %c0_i32_0 = arith.constant 0 : i32
    return %arg0, %c0_i32 : i32, i32
  }
}

</mosaic_0001>

<llo_original>
// kernel: bert_layer_norm.1
$region0: #{bert_layer_norm.1}
  #allocation0 [shape = 'u32[]', space=smem, size = 0x4, offset = 0x4, fixed_abs, tag = 'smem constant byte address 0x4 - core index']
  #allocation1 [shape = 'u32[72,128]{1,0:T(1,128)}', space=vmem, size = 0x9000, scoped, tag = 'internal scratch']
  %s0 = inlined_call_operand.hbm [shape: f32[16,32], index: 0, kind: input, shape index: {}]
  %s1 = inlined_call_operand.vmem [shape: f32[1,32], index: 1, kind: input, shape index: {}]
  %s2 = inlined_call_operand.vmem [shape: f32[1,32], index: 2, kind: input, shape index: {}]
  %s3 = inlined_call_operand.hbm [shape: f32[16,32], index: 3, kind: output, shape index: {}]
  %s4 = sld [smem:[#allocation0]]
  $region49: #{bert_layer_norm.1} parent=0
    _
  %s6 = ssub.s32 1, %s4
  %s7 = scalar_select 0, %s6, %s4
  $region1: #{bert_layer_norm.1} parent=0
    #allocation2 [shape = 'u8[8192]{0}', space=vmem, size = 0x2000, scoped, tag = 'input window, operand 0']
    #allocation3 [shape = 's32[2]{0}', space=sflag, size = 0x8, scoped, tag = 'scoped memory for bert_layer_norm.1']
    #allocation4 [shape = 's32[2]{0}', space=sflag, size = 0x8, scoped, tag = 'scoped memory for bert_layer_norm.1']
    #allocation5 [shape = 'u8[8192]{0}', space=vmem, size = 0x2000, scoped, tag = 'output window, operand 0']
    %8 = vsyncpa [#allocation3], 0
    %s9 = scalar_lea.sflag [#allocation3], 1
    %10 = vsyncpa %s9, 0
    %11 = vsyncpa [#allocation4], 0
    %s12 = scalar_lea.sflag [#allocation4], 1
    %13 = vsyncpa %s12, 0
    loop: start=0, step=1, limit=4
    $region2: #{bert_layer_norm.1} parent=1 // loop_pre_header
      _
    $region3: #{bert_layer_norm.1} parent=1 // loop_header
      %s15 = sphi 0, %s19
      %p16 = scmp.ge.s32.totalorder %s15, 4
      %s25 = sphi 0, %s27
      %s28 = sphi 0, %s25
      %s29 = sphi 0, %s28
      %s45 = sphi 0, %s29
      %s49 = sphi 0, %s49
      %s51 = sphi 0, %s49
      %s52 = sphi 0, %s51
      %s66 = sphi 0, %s52
      %s70 = sphi 0, %s70
      %s72 = sphi 0, %s70
      %s73 = sphi 0, %s72
      %s87 = sphi 0, %s73
      %s93 = sphi 0, %s95
      %s96 = sphi 0, %s93
      %s97 = sphi 0, %s96
      %s113 = sphi 0, %s97
    $region4: #{bert_layer_norm.1} parent=1 // loop_header_branch
      %18 = sbr.rel (%p16) target = $region8
    $region5: #{bert_layer_norm.1} parent=1 // loop_body
      %s20 = ssub.s32 %s15, 1
      %s21 = ssub.s32 %s15, 2
      %s22 = sadd.s32 %s15, 1
      %s23 = ssub.s32 %s15, %s22
      %p24 = scmp.eq.s32.totalorder %s23, 0
      %s26 = sadd.s32 %s25, 1
      %s27 = scalar_select %p24, %s25, %s26
      %p30 = pneg %p24
      %p31 = scmp.eq.s32.totalorder %s15, 1
      %p32 = por %p30, %p31
      %p33 = scmp.ne.s32.totalorder %s25, %s28
      %p34 = scmp.eq.s32.totalorder %s15, 0
      %p35 = por %p33, %p34
      %p36 = scmp.ne.s32.totalorder %s25, %s28
      %p37 = scmp.eq.s32.totalorder %s20, 1
      %p38 = por %p36, %p37
      %p39 = scmp.ne.s32.totalorder %s28, %s29
      %p40 = scmp.eq.s32.totalorder %s20, 0
      %p41 = por %p39, %p40
      %p42 = scmp.ne.s32.totalorder %s28, %s29
      %p43 = scmp.eq.s32.totalorder %s21, 1
      %p44 = por %p42, %p43
      %p46 = scmp.ne.s32.totalorder %s29, %s45
      %p47 = scmp.eq.s32.totalorder %s21, 0
      %p48 = por %p46, %p47
      %s50 = sadd.s32 %s49, 1
      %p53 = scmp.eq.s32.totalorder %s15, 1
      %p54 = scmp.ne.s32.totalorder %s49, %s51
      %p55 = scmp.eq.s32.totalorder %s15, 0
      %p56 = por %p54, %p55
      %p57 = scmp.ne.s32.totalorder %s49, %s51
      %p58 = scmp.eq.s32.totalorder %s20, 1
      %p59 = por %p57, %p58
      %p60 = scmp.ne.s32.totalorder %s51, %s52
      %p61 = scmp.eq.s32.totalorder %s20, 0
      %p62 = por %p60, %p61
      %p63 = scmp.ne.s32.totalorder %s51, %s52
      %p64 = scmp.eq.s32.totalorder %s21, 1
      %p65 = por %p63, %p64
      %p67 = scmp.ne.s32.totalorder %s52, %s66
      %p68 = scmp.eq.s32.totalorder %s21, 0
      %p69 = por %p67, %p68
      %s71 = sadd.s32 %s70, 1
      %p74 = scmp.eq.s32.totalorder %s15, 1
      %p75 = scmp.ne.s32.totalorder %s70, %s72
      %p76 = scmp.eq.s32.totalorder %s15, 0
      %p77 = por %p75, %p76
      %p78 = scmp.ne.s32.totalorder %s70, %s72
      %p79 = scmp.eq.s32.totalorder %s20, 1
      %p80 = por %p78, %p79
      %p81 = scmp.ne.s32.totalorder %s72, %s73
      %p82 = scmp.eq.s32.totalorder %s20, 0
      %p83 = por %p81, %p82
      %p84 = scmp.ne.s32.totalorder %s72, %s73
      %p85 = scmp.eq.s32.totalorder %s21, 1
      %p86 = por %p84, %p85
      %p88 = scmp.ne.s32.totalorder %s73, %s87
      %p89 = scmp.eq.s32.totalorder %s21, 0
      %p90 = por %p88, %p89
      %s91 = ssub.s32 %s15, %s22
      %p92 = scmp.eq.s32.totalorder %s91, 0
      %s94 = sadd.s32 %s93, 1
      %s95 = scalar_select %p92, %s93, %s94
      %p98 = pneg %p92
      %p99 = scmp.eq.s32.totalorder %s15, 1
      %p100 = por %p98, %p99
      %p101 = scmp.ne.s32.totalorder %s93, %s96
      %p102 = scmp.eq.s32.totalorder %s15, 0
      %p103 = por %p101, %p102
      %p104 = scmp.ne.s32.totalorder %s93, %s96
      %p105 = scmp.eq.s32.totalorder %s20, 1
      %p106 = por %p104, %p105
      %p107 = scmp.ne.s32.totalorder %s96, %s97
      %p108 = scmp.eq.s32.totalorder %s20, 0
      %p109 = por %p107, %p108
      %p110 = scmp.ne.s32.totalorder %s96, %s97
      %p111 = scmp.eq.s32.totalorder %s21, 1
      %p112 = por %p110, %p111
      %p114 = scmp.ne.s32.totalorder %s97, %s113
      %p115 = scmp.eq.s32.totalorder %s21, 0
      %p116 = por %p114, %p115
      %p117 = scmp.le.s32.totalorder 1, %s15
      %p118 = scmp.lt.s32.totalorder %s15, 3
      %p119 = pnand %p117, %p118
      %p120 = pneg %p119
      // Predicated region
      $region9: #{bert_layer_norm.1} parent=5 // pred_check
        _
      $region10: #{bert_layer_norm.1} parent=5 // pred_check_branch
        %122 = sbr.rel (%p119) target = $region12
      $region11: #{bert_layer_norm.1} parent=5 // pred_region
        %s123 = ssub.s32 %s15, 1
        // Predicated region
        $region13: #{bert_layer_norm.1} parent=11 // pred_check
          %p124 = pneg %p62
        $region14: #{bert_layer_norm.1} parent=11 // pred_check_branch
          %126 = sbr.rel (%p124) target = $region16
        $region15: #{bert_layer_norm.1} parent=11 // pred_region
          _
        $region16: #{bert_layer_norm.1} parent=11 // pred_fallthru
          _
        // Predicated region
        $region17: #{bert_layer_norm.1} parent=11 // pred_check
          %p127 = pneg %p83
        $region18: #{bert_layer_norm.1} parent=11 // pred_check_branch
          %129 = sbr.rel (%p127) target = $region20
        $region19: #{bert_layer_norm.1} parent=11 // pred_region
          _
        $region20: #{bert_layer_norm.1} parent=11 // pred_fallthru
          _
      $region12: #{bert_layer_norm.1} parent=5 // pred_fallthru
        _
      %p130 = scmp.lt.s32.totalorder %s15, 2
      // Predicated region
      $region21: #{bert_layer_norm.1} parent=5 // pred_check
        %p131 = pneg %p130
      $region22: #{bert_layer_norm.1} parent=5 // pred_check_branch
        %133 = sbr.rel (%p131) target = $region24
      $region23: #{bert_layer_norm.1} parent=5 // pred_region
        // Predicated region
        $region25: #{bert_layer_norm.1} parent=23 // pred_check
          %p134 = pneg %p35
        $region26: #{bert_layer_norm.1} parent=23 // pred_check_branch
          %136 = sbr.rel (%p134) target = $region28
        $region27: #{bert_layer_norm.1} parent=23 // pred_region
          %s137 = sand.u32 %s25, 1
          %s138 = scalar_lea.sflag [#allocation3], %s137
          %s139 = sand.u32 %s25, 1
          %s140 = smul.addr %s139, 8
          %s141 = scalar_lea.vmem [#allocation2], %s140
          %143 = vsyncadd %s138, 0
          %s144 = smul.addr %s15, 8
          %s145 = scalar_lea.hbm %s0, %s144
          %s147 = sshll.u32 %s145, 4
          %s148 = int_to_ptr.hbm [resolvable:$true] %s147
          %s149 = sshll.u32 %s141, 4
          %s150 = int_to_ptr.vmem [resolvable:$true] %s149
          %152 = dma.hbm_to_vmem [thread:$0]  %s148, 128, %s150, %s138
        $region28: #{bert_layer_norm.1} parent=23 // pred_fallthru
          _
      $region24: #{bert_layer_norm.1} parent=5 // pred_fallthru
        _
      %p153 = scmp.le.s32.totalorder 1, %s15
      %p154 = scmp.lt.s32.totalorder %s15, 3
      %p155 = pnand %p153, %p154
      %p156 = pneg %p155
      // Predicated region
      $region29: #{bert_layer_norm.1} parent=5 // pred_check
        _
      $region30: #{bert_layer_norm.1} parent=5 // pred_check_branch
        %158 = sbr.rel (%p155) target = $region32
      $region31: #{bert_layer_norm.1} parent=5 // pred_region
        %s159 = ssub.s32 %s15, 1
        %s160 = sand.u32 %s28, 1
        %s161 = scalar_lea.sflag [#allocation3], %s160
        %s162 = sand.u32 %s28, 1
        %s163 = smul.addr %s162, 8
        %s164 = scalar_lea.vmem [#allocation2], %s163
        // Predicated region
        $region33: #{bert_layer_norm.1} parent=31 // pred_check
          %p165 = pneg %p41
        $region34: #{bert_layer_norm.1} parent=31 // pred_check_branch
          %167 = sbr.rel (%p165) target = $region36
        $region35: #{bert_layer_norm.1} parent=31 // pred_region
          %169 = dma.done %s161, 128
        $region36: #{bert_layer_norm.1} parent=31 // pred_fallthru
          _
        %s170 = sand.u32 %s28, 1
        %s171 = scalar_lea.sflag [#allocation3], %s170
        %s172 = sand.u32 %s28, 1
        %s173 = smul.addr %s172, 8
        %s174 = scalar_lea.vmem [#allocation2], %s173
        %p175 = pneg %p41
        %p176 = pneg %p38
        %p177 = pneg %p62
        %p178 = pneg %p59
        %p179 = pneg %p83
        %p180 = pneg %p80
        %p181 = pneg %p109
        %p182 = pneg %p106
        %s183 = sand.u32 %s96, 1
        %s184 = scalar_lea.sflag [#allocation4], %s183
        %s185 = sand.u32 %s96, 1
        %s186 = smul.addr %s185, 8
        %s187 = scalar_lea.vmem [#allocation5], %s186
        %v188 = vld [vmem:[%s164] sm:$0xff]
        %v189 = vld [vmem:[%s1] sm:$0x1]
        %v190 = vld [vmem:[%s2] sm:$0x1]
        %vm191 = vcmask 261120
        %v192 = vsel %vm191, %v188, 0.0
        %193 = vadd.xlane.f32.xlu0 %v192
        %v194 = vpop.xlane.xlu0 %193
        %v195 = vmul.f32 %v194, 0.03125
        %v196 = vsub.f32 %v188, %v195
        %v197 = vmul.f32 %v196, %v196
        %v198 = vsel %vm191, %v197, 0.0
        %199 = vadd.xlane.f32.xlu0 %v198
        %v200 = vpop.xlane.xlu0 %199
        %v201 = vmul.f32 %v200, 0.03125
        %v202 = vadd.f32 %v201, 1e-05
        %v203 = vrsqrt.pop %v202
        %v204 = vmul.f32 %v203, %v202
        %v205 = vmul.f32 %v204, %v203
        %v206 = vmul.f32 0.5, %v205
        %v207 = vsub.f32 1.5, %v206
        %v208 = vmul.f32 %v203, %v207
        %vm209 = vweird.f32 %v202
        %vm210 = vweird.f32 %v203
        %vm211 = vmor %vm209, %vm210
        %v212 = vsel %vm211, %v203, %v208
        %v213 = vmul.f32 %v196, %v212
        %v215 = vperm.slane %v189, 0
        %v217 = vmul.f32 %v215, %v213
        %v219 = vperm.slane %v190, 0
        %v221 = vadd.f32 %v217, %v219
        %222 = vst.msk [vmem:[%s187] sm:$0xff] %vm191, %v221
        %s223 = sand.u32 %s96, 1
        %s224 = scalar_lea.sflag [#allocation4], %s223
        %s225 = sand.u32 %s96, 1
        %s226 = smul.addr %s225, 8
        %s227 = scalar_lea.vmem [#allocation5], %s226
        // Predicated region
        $region37: #{bert_layer_norm.1} parent=31 // pred_check
          %p228 = pneg %p106
        $region38: #{bert_layer_norm.1} parent=31 // pred_check_branch
          %230 = sbr.rel (%p228) target = $region40
        $region39: #{bert_layer_norm.1} parent=31 // pred_region
          %232 = vsyncadd %s224, 0
          %s233 = smul.addr %s20, 8
          %s234 = scalar_lea.hbm %s3, %s233
          %s236 = sshll.u32 %s227, 4
          %s237 = int_to_ptr.vmem [resolvable:$true] %s236
          %s238 = sshll.u32 %s234, 4
          %s239 = int_to_ptr.hbm [resolvable:$true] %s238
          %241 = dma.vmem_to_hbm [thread:$0]  %s237, 128, %s239, %s224
        $region40: #{bert_layer_norm.1} parent=31 // pred_fallthru
          _
      $region32: #{bert_layer_norm.1} parent=5 // pred_fallthru
        _
      %p242 = scmp.le.s32.totalorder 2, %s15
      // Predicated region
      $region41: #{bert_layer_norm.1} parent=5 // pred_check
        %p243 = pneg %p242
      $region42: #{bert_layer_norm.1} parent=5 // pred_check_branch
        %245 = sbr.rel (%p243) target = $region44
      $region43: #{bert_layer_norm.1} parent=5 // pred_region
        %s246 = ssub.s32 %s15, 2
        // Predicated region
        $region45: #{bert_layer_norm.1} parent=43 // pred_check
          %p247 = pneg %p112
        $region46: #{bert_layer_norm.1} parent=43 // pred_check_branch
          %249 = sbr.rel (%p247) target = $region48
        $region47: #{bert_layer_norm.1} parent=43 // pred_region
          %s250 = sand.u32 %s97, 1
          %s251 = scalar_lea.sflag [#allocation4], %s250
          %s252 = sand.u32 %s97, 1
          %s253 = smul.addr %s252, 8
          %s254 = scalar_lea.vmem [#allocation5], %s253
          %256 = dma.done %s251, 128
        $region48: #{bert_layer_norm.1} parent=43 // pred_fallthru
          _
      $region44: #{bert_layer_norm.1} parent=5 // pred_fallthru
        _
    $region6: #{bert_layer_norm.1} parent=1 // loop_footer
      %s19 = sadd.s32 1, %s15
    $region7: #{bert_layer_norm.1} parent=1 // loop_footer_branch
      %14 = sbr.rel target = $region3
    $region8: #{bert_layer_norm.1} parent=1 // loop_exit
      _
    %257 = vsyncpa [#allocation3], 1
    %s258 = scalar_lea.sflag [#allocation3], 1
    %259 = vsyncpa %s258, 1
    %260 = vsyncpa [#allocation4], 1
    %s261 = scalar_lea.sflag [#allocation4], 1
    %262 = vsyncpa %s261, 1

</llo_original>
